<compile_context>
chip_gen: v7x
topology: tpu7x:2x2x1
jax: 0.10.0
libtpu: 0.0.40
codegen_flags: <defaults>
</compile_context>

<pallas_src>
import functools

import jax
import jax.numpy as jnp
from jax.experimental import pallas as pl
from jax.experimental.pallas import tpu as pltpu

_LANES = 128
_SUBLANES = 8
_MAX_TILE_ROWS = 2048  # 2048 x 128 x 4B = 1 MiB per f32 input tile


def _round_up(x, m):
    return ((x + m - 1) // m) * m


def _sublane_multiple(*dtypes):
    # Packed dtypes need more sublanes per native tile (f32 -> 8, bf16 -> 16,
    # int8/bool -> 32).
    m = _SUBLANES
    for dt in dtypes:
        m = max(m, (4 * _SUBLANES) // jnp.dtype(dt).itemsize)
    return m


def _dice_partials_kernel(p_ref, t_ref, out_ref, *, rows, tile_rows,
                          round_preds, need_abs, need_mask):
    p = p_ref[...].astype(jnp.float32)
    t = t_ref[...].astype(jnp.float32)

    if need_mask:
        # Last block may overhang the (rows, 128) array; zero the overhang.
        base = pl.program_id(0) * tile_rows
        rid = base + jax.lax.broadcasted_iota(
            jnp.int32, (tile_rows, _LANES), 0)
        valid = rid < rows
        p = jnp.where(valid, p, 0.0)
        t = jnp.where(valid, t, 0.0)

    if round_preds:  # evaluation_mode: torch.round (round-half-to-even)
        p = jnp.round(p)

    def fold(x):
        # (tile_rows, 128) -> (8, 128) partial sums via pure VPU vreg adds
        # (reshape keeps the native (8, 128) tiling; the reduced axis is the
        # untiled leading one).
        return jnp.sum(x.reshape(-1, _SUBLANES, _LANES), axis=0)

    out_ref[0, 0, :, :] = fold(p * t)
    out_ref[0, 1, :, :] = fold(p)
    out_ref[0, 2, :, :] = fold(t)
    if need_abs:
        out_ref[0, 3, :, :] = fold(jnp.abs(p - t))


def _dice_partials(p_flat, t_flat, *, round_preds, need_abs):
    """Returns (sum(p*t), sum(p), sum(t)[, sum(|p-t|)]) as f32 scalars."""
    n = p_flat.shape[0]
    rem = n % _LANES
    if rem:
        # Fallback only when the flat size is not lane-aligned: a minimal
        # zero-pad so the array can be viewed as (rows, 128). Zeros are
        # neutral for every reduction below.
        pad = _LANES - rem
        p_flat = jnp.pad(p_flat, (0, pad))
        t_flat = jnp.pad(t_flat, (0, pad))
    rows = p_flat.shape[0] // _LANES
    p2 = p_flat.reshape(rows, _LANES)
    t2 = t_flat.reshape(rows, _LANES)

    mult = _sublane_multiple(p2.dtype, t2.dtype)
    tile_rows = min(_round_up(_MAX_TILE_ROWS, mult), _round_up(rows, mult))
    grid = pl.cdiv(rows, tile_rows)
    need_mask = (grid * tile_rows != rows)
    nq = 4 if need_abs else 3

    kernel = functools.partial(
        _dice_partials_kernel, rows=rows, tile_rows=tile_rows,
        round_preds=round_preds, need_abs=need_abs, need_mask=need_mask)

    partials = pl.pallas_call(
        kernel,
        out_shape=jax.ShapeDtypeStruct((grid, nq, _SUBLANES, _LANES),
                                       jnp.float32),
        grid_spec=pltpu.PrefetchScalarGridSpec(
            num_scalar_prefetch=0,
            grid=(grid,),
            in_specs=[
                pl.BlockSpec((tile_rows, _LANES), lambda i: (i, 0)),
                pl.BlockSpec((tile_rows, _LANES), lambda i: (i, 0)),
            ],
            out_specs=pl.BlockSpec((1, nq, _SUBLANES, _LANES),
                                   lambda i: (i, 0, 0, 0)),
        ),
        compiler_params=pltpu.CompilerParams(
            dimension_semantics=("parallel",)),
    )(p2, t2)

    # Tiny final reduction (grid x nq x 8 x 128 f32) in plain JAX.
    sums = jnp.sum(partials, axis=(0, 2, 3))
    return tuple(sums[i] for i in range(nq))


def dice_loss(preds, targets, smooth: float = 0.001,
              evaluation_mode: bool = False):
    """Matches DiceLoss.forward from the PyTorch reference."""
    p = preds.reshape(-1)
    t = targets.reshape(-1)
    n = p.shape[0]

    if evaluation_mode:
        s_pt, s_p, s_t = _dice_partials(p, t, round_preds=True,
                                        need_abs=False)
        dice = (2.0 * s_pt + smooth) / (s_p + s_t + smooth)
        return 1.0 - dice

    s_pt, s_p, s_t, s_abs = _dice_partials(p, t, round_preds=False,
                                           need_abs=True)
    dice = (2.0 * s_pt + smooth) / (s_p + s_t + smooth)
    check_tar = jnp.clip(s_t, 0.0, 1.0)
    mean_abs = s_abs / jnp.float32(n)
    return check_tar * (1.0 - dice) + (1.0 - check_tar) * mean_abs


def _dice_loss_ref(preds, targets, smooth=0.001, evaluation_mode=False):
    """Pure-JAX reference for correctness check."""
    p = preds.reshape(-1).astype(jnp.float32)
    t = targets.reshape(-1).astype(jnp.float32)
    if evaluation_mode:
        p = jnp.round(p)
        inter = jnp.sum(p * t)
        dice = (2.0 * inter + smooth) / (jnp.sum(p) + jnp.sum(t) + smooth)
        return 1.0 - dice
    inter = jnp.sum(p * t)
    dice = (2.0 * inter + smooth) / (jnp.sum(p) + jnp.sum(t) + smooth)
    check_tar = jnp.clip(jnp.sum(t), 0.0, 1.0)
    return check_tar * (1.0 - dice) + (1.0 - check_tar) * jnp.mean(
        jnp.abs(p - t))


if __name__ == "__main__":
    key = jax.random.PRNGKey(0)

    train_fn = jax.jit(lambda p, t: dice_loss(p, t))
    eval_fn = jax.jit(lambda p, t: dice_loss(p, t, evaluation_mode=True))

    test_shapes = [
        (2, 4, 16, 16),    # lane-aligned, single tile, grid=1
        (2, 3, 37, 53),    # ragged size: pad-to-128 fallback + in-kernel mask
        (1, 1, 640, 640),  # multi-tile path: tile_rows=2048, grid=2, masked tail
    ]
    for shape in test_shapes:
        k1, k2, key = jax.random.split(key, 3)
        preds = jax.nn.sigmoid(jax.random.normal(k1, shape, jnp.float32))
        targets = (jax.random.uniform(k2, shape) > 0.5).astype(jnp.float32)

        loss_train = jax.block_until_ready(train_fn(preds, targets))
        loss_eval = jax.block_until_ready(eval_fn(preds, targets))

        ref_train = _dice_loss_ref(preds, targets)
        ref_eval = _dice_loss_ref(preds, targets, evaluation_mode=True)

        assert jnp.allclose(loss_train, ref_train, atol=1e-5, rtol=1e-5), (
            shape, loss_train, ref_train)
        assert jnp.allclose(loss_eval, ref_eval, atol=1e-5, rtol=1e-5), (
            shape, loss_eval, ref_eval)

    print("KERNEL_OK")
</pallas_src>

<mosaic_0001>
module attributes {stable_mosaic.version = 11 : i64} {
  func.func @_dice_partials_kernel(%arg0: i32, %arg1: memref<16x128xf32, #tpu.memory_space<vmem>>, %arg2: memref<16x128xf32, #tpu.memory_space<vmem>>, %arg3: memref<1x4x8x128xf32, #tpu.memory_space<vmem>>) attributes {dimension_semantics = [#tpu.dimension_semantics<parallel>], iteration_bounds = array<i64: 1>, scalar_prefetch = 0 : i64, scratch_operands = 0 : i64, tpu.core_type = #tpu.core_type<tc>, window_params = [{transform_indices = @transform_0, window_bounds = array<i64: 16, 128>}, {transform_indices = @transform_1, window_bounds = array<i64: 16, 128>}, {transform_indices = @transform_2, window_bounds = array<i64: 1, 4, 8, 128>}]} {
    %c0 = arith.constant 0 : index
    %c0_0 = arith.constant 0 : index
    %0 = vector.load %arg1[%c0, %c0_0] : memref<16x128xf32, #tpu.memory_space<vmem>>, vector<16x128xf32>
    %c0_1 = arith.constant 0 : index
    %c0_2 = arith.constant 0 : index
    %1 = vector.load %arg2[%c0_1, %c0_2] : memref<16x128xf32, #tpu.memory_space<vmem>>, vector<16x128xf32>
    %2 = arith.mulf %0, %1 : vector<16x128xf32>
    %3 = vector.shape_cast %2 : vector<16x128xf32> to vector<2x8x128xf32>
    %cst = arith.constant dense<0.000000e+00> : vector<8x128xf32>
    %4 = vector.multi_reduction <add>, %3, %cst [0] : vector<2x8x128xf32> to vector<8x128xf32>
    %c0_3 = arith.constant 0 : index
    %c0_4 = arith.constant 0 : index
    %c0_5 = arith.constant 0 : index
    %c0_6 = arith.constant 0 : index
    %5 = vector.load %arg3[%c0_3, %c0_4, %c0_5, %c0_6] : memref<1x4x8x128xf32, #tpu.memory_space<vmem>>, vector<1x1x8x128xf32>
    %6 = vector.shape_cast %5 : vector<1x1x8x128xf32> to vector<8x128xf32>
    %7 = vector.shape_cast %4 : vector<8x128xf32> to vector<1x1x8x128xf32>
    tpu.vector_store %arg3[%c0_3, %c0_4, %c0_5, %c0_6], %7 {strides = array<i32>} : memref<1x4x8x128xf32, #tpu.memory_space<vmem>>, vector<1x1x8x128xf32>,
    %8 = vector.shape_cast %0 : vector<16x128xf32> to vector<2x8x128xf32>
    %cst_7 = arith.constant dense<0.000000e+00> : vector<8x128xf32>
    %9 = vector.multi_reduction <add>, %8, %cst_7 [0] : vector<2x8x128xf32> to vector<8x128xf32>
    %c0_8 = arith.constant 0 : index
    %c1 = arith.constant 1 : index
    %c0_9 = arith.constant 0 : index
    %c0_10 = arith.constant 0 : index
    %10 = vector.load %arg3[%c0_8, %c1, %c0_9, %c0_10] : memref<1x4x8x128xf32, #tpu.memory_space<vmem>>, vector<1x1x8x128xf32>
    %11 = vector.shape_cast %10 : vector<1x1x8x128xf32> to vector<8x128xf32>
    %12 = vector.shape_cast %9 : vector<8x128xf32> to vector<1x1x8x128xf32>
    tpu.vector_store %arg3[%c0_8, %c1, %c0_9, %c0_10], %12 {strides = array<i32>} : memref<1x4x8x128xf32, #tpu.memory_space<vmem>>, vector<1x1x8x128xf32>,
    %13 = vector.shape_cast %1 : vector<16x128xf32> to vector<2x8x128xf32>
    %cst_11 = arith.constant dense<0.000000e+00> : vector<8x128xf32>
    %14 = vector.multi_reduction <add>, %13, %cst_11 [0] : vector<2x8x128xf32> to vector<8x128xf32>
    %c0_12 = arith.constant 0 : index
    %c2 = arith.constant 2 : index
    %c0_13 = arith.constant 0 : index
    %c0_14 = arith.constant 0 : index
    %15 = vector.load %arg3[%c0_12, %c2, %c0_13, %c0_14] : memref<1x4x8x128xf32, #tpu.memory_space<vmem>>, vector<1x1x8x128xf32>
    %16 = vector.shape_cast %15 : vector<1x1x8x128xf32> to vector<8x128xf32>
    %17 = vector.shape_cast %14 : vector<8x128xf32> to vector<1x1x8x128xf32>
    tpu.vector_store %arg3[%c0_12, %c2, %c0_13, %c0_14], %17 {strides = array<i32>} : memref<1x4x8x128xf32, #tpu.memory_space<vmem>>, vector<1x1x8x128xf32>,
    %18 = arith.subf %0, %1 : vector<16x128xf32>
    %19 = math.absf %18 : vector<16x128xf32>
    %20 = vector.shape_cast %19 : vector<16x128xf32> to vector<2x8x128xf32>
    %cst_15 = arith.constant dense<0.000000e+00> : vector<8x128xf32>
    %21 = vector.multi_reduction <add>, %20, %cst_15 [0] : vector<2x8x128xf32> to vector<8x128xf32>
    %c0_16 = arith.constant 0 : index
    %c3 = arith.constant 3 : index
    %c0_17 = arith.constant 0 : index
    %c0_18 = arith.constant 0 : index
    %22 = vector.load %arg3[%c0_16, %c3, %c0_17, %c0_18] : memref<1x4x8x128xf32, #tpu.memory_space<vmem>>, vector<1x1x8x128xf32>
    %23 = vector.shape_cast %22 : vector<1x1x8x128xf32> to vector<8x128xf32>
    %24 = vector.shape_cast %21 : vector<8x128xf32> to vector<1x1x8x128xf32>
    tpu.vector_store %arg3[%c0_16, %c3, %c0_17, %c0_18], %24 {strides = array<i32>} : memref<1x4x8x128xf32, #tpu.memory_space<vmem>>, vector<1x1x8x128xf32>,
    return
  }
  func.func @transform_0(%arg0: i32) -> (i32, i32) {
    %c0_i32 = arith.constant 0 : i32
    %c0_i32_0 = arith.constant 0 : i32
    return %arg0, %c0_i32 : i32, i32
  }
  func.func @transform_1(%arg0: i32) -> (i32, i32) {
    %c0_i32 = arith.constant 0 : i32
    %c0_i32_0 = arith.constant 0 : i32
    return %arg0, %c0_i32 : i32, i32
  }
  func.func @transform_2(%arg0: i32) -> (i32, i32, i32, i32) {
    %c0_i32 = arith.constant 0 : i32
    %c0_i32_0 = arith.constant 0 : i32
    %c0_i32_1 = arith.constant 0 : i32
    %c0_i32_2 = arith.constant 0 : i32
    return %arg0, %c0_i32, %c0_i32_0, %c0_i32_1 : i32, i32, i32, i32
  }
}

</mosaic_0001>

<llo_original>
// kernel: _lambda_.1
$region0: #{_lambda_.1}
  #allocation0 [shape = 'u32[]', space=smem, size = 0x4, offset = 0x4, fixed_abs, tag = 'smem constant byte address 0x4 - core index']
  #allocation1 [shape = 'u32[144,128]{1,0:T(1,128)}', space=vmem, size = 0x12000, scoped, tag = 'internal scratch']
  %s0 = inlined_call_operand.vmem [shape: f32[16,128], index: 0, kind: input, shape index: {}]
  %s1 = inlined_call_operand.vmem [shape: f32[16,128], index: 1, kind: input, shape index: {}]
  %s2 = inlined_call_operand.vmem [shape: f32[1,4,8,128], index: 2, kind: output, shape index: {}]
  %s3 = sld [smem:[#allocation0]]
  $region18: #{_lambda_.1} parent=0
    _
  %s5 = ssub.s32 1, %s3
  %s6 = scalar_select 0, %s5, %s3
  // Predicated region
  $region2: #{_lambda_.1} parent=0 // pred_check
    _
  $region3: #{_lambda_.1} parent=0 // pred_check_branch
    %8 = sbr.rel (0) target = $region5
  $region4: #{_lambda_.1} parent=0 // pred_region
    _
  $region5: #{_lambda_.1} parent=0 // pred_fallthru
    _
  // Predicated region
  $region6: #{_lambda_.1} parent=0 // pred_check
    _
  $region7: #{_lambda_.1} parent=0 // pred_check_branch
    %10 = sbr.rel (0) target = $region9
  $region8: #{_lambda_.1} parent=0 // pred_region
    _
  $region9: #{_lambda_.1} parent=0 // pred_fallthru
    _
  %v11 = vld [vmem:[%s0] sm:$0xff]
  %v12 = vld [vmem:[%s0 + $0x8] sm:$0xff]
  %v13 = vld [vmem:[%s1] sm:$0xff]
  %v14 = vld [vmem:[%s1 + $0x8] sm:$0xff]
  %v15 = vmul.f32 %v11, %v13
  %v16 = vmul.f32 %v12, %v14
  %v17 = vadd.f32 %v15, %v16
  %18 = vst [vmem:[%s2] sm:$0xff] %v17
  %v19 = vadd.f32 %v11, %v12
  %s20 = scalar_lea.vmem %s2, 8
  %21 = vst [vmem:[%s20] sm:$0xff] %v19
  %v22 = vadd.f32 %v13, %v14
  %s23 = scalar_lea.vmem %s2, 16
  %24 = vst [vmem:[%s23] sm:$0xff] %v22
  %v25 = vsub.f32 %v11, %v13
  %v26 = vsub.f32 %v12, %v14
  %v27 = vand.u32 2147483647, %v25
  %v28 = vand.u32 2147483647, %v26
  %v29 = vadd.f32 %v27, %v28
  %s30 = scalar_lea.vmem %s2, 24
  %31 = vst [vmem:[%s30] sm:$0xff] %v29
  // Predicated region
  $region10: #{_lambda_.1} parent=0 // pred_check
    _
  $region11: #{_lambda_.1} parent=0 // pred_check_branch
    %33 = sbr.rel (0) target = $region13
  $region12: #{_lambda_.1} parent=0 // pred_region
    _
  $region13: #{_lambda_.1} parent=0 // pred_fallthru
    _
  // Predicated region
  $region14: #{_lambda_.1} parent=0 // pred_check
    _
  $region15: #{_lambda_.1} parent=0 // pred_check_branch
    %35 = sbr.rel (0) target = $region17
  $region16: #{_lambda_.1} parent=0 // pred_region
    _
  $region17: #{_lambda_.1} parent=0 // pred_fallthru
    _

</llo_original>
